<compile_context>
chip_gen: v6e
topology: v6e:2x2x1
jax: 0.10.0
libtpu: 0.0.40
codegen_flags: <defaults>
</compile_context>

<pallas_src>
import functools

import jax
import jax.numpy as jnp
from jax.experimental import pallas as pl
from jax.experimental.pallas import tpu as pltpu


# --------------------------------------------------------------------------- #
# Kernel
# --------------------------------------------------------------------------- #
def _seghead_kernel(xk_ref, w1_ref, bias_ref, w2_ref, o_ref, *,
                    lane_tile, n_lane_tiles):
    """One (batch, spatial-block) grid step.

    xk_ref  : (9*Cin, SB)      im2col'ed input, channel-major, spatial on lanes
    w1_ref  : (Cmid, 9*Cin)    3x3 conv weights, BN scale folded in
    bias_ref: (Cmid, 1) f32    folded BN shift
    w2_ref  : (n_classes, Cmid) 1x1 conv weights
    o_ref   : (n_classes, SB)  lane-dense output block (NCHW, spatial flattened)

    The SB spatial block is processed in lane-aligned sub-tiles of `lane_tile`
    lanes; all intermediates for a sub-tile live in vregs (no VMEM scratch).
    """
    for t in range(n_lane_tiles):           # static trip count, independent iters
        j = t * lane_tile
        x_t = xk_ref[:, j:j + lane_tile]                       # (9Cin, TL) aligned
        acc = jax.lax.dot_general(                             # (Cmid, TL) f32
            w1_ref[...], x_t,
            dimension_numbers=(((1,), (0,)), ((), ())),
            preferred_element_type=jnp.float32)
        # Folded BatchNorm shift + ReLU (scale already folded into w1), f32.
        y = jnp.maximum(acc + bias_ref[...], 0.0)
        # 1x1 conv, still channel-major -> lane-dense (n_classes, TL) result.
        out = jax.lax.dot_general(
            w2_ref[...], y.astype(w2_ref.dtype),
            dimension_numbers=(((1,), (0,)), ((), ())),
            preferred_element_type=jnp.float32)
        o_ref[:, j:j + lane_tile] = out.astype(o_ref.dtype)


# --------------------------------------------------------------------------- #
# Tiling helpers (generation-aware)
# --------------------------------------------------------------------------- #
def _tpu_vmem_capacity_bytes():
    """Per-core VMEM capacity; conservative 64 MiB (v7x) if query unavailable."""
    try:
        cap = int(pltpu.get_tpu_info().vmem_capacity_bytes)
        if cap > 0:
            return cap
    except Exception:
        pass
    return 64 << 20


def _pick_spatial_block(HW, cin9, cmid, n_classes, in_item, out_item,
                        budget_bytes, n_batch):
    """Largest lane-dense spatial block (divides H*W, multiple of 128) whose
    double-buffered input/output blocks + double-buffered weights fit the
    per-step VMEM budget. Prefers >=2 blocks when batch==1 (megacore/2-TC)."""
    w_bytes = (cmid * cin9 + n_classes * cmid) * in_item + cmid * 4

    def fits(sb):
        in_b = sb * cin9 * in_item
        out_b = sb * n_classes * out_item
        return 2 * (in_b + out_b) + 2 * w_bytes <= budget_bytes

    if HW % 128 != 0:
        return HW                                # tiny/odd image: single block
    cands = [d for d in range(128, HW + 1, 128) if HW % d == 0]
    fitting = [d for d in cands if fits(d)]
    if not fitting:
        return cands[0]                          # smallest lane-dense block
    if n_batch == 1:
        multi = [d for d in fitting if HW // d >= 2]
        if multi:
            return max(multi)
    return max(fitting)


def _pick_lane_tile(sb, cmid, acc_budget_bytes=96 * 1024):
    """Largest lane sub-tile (multiple of 128, divides sb) keeping the
    (Cmid, TL) f32 accumulator well under the 256 KiB vreg file."""
    if sb % 128 != 0:
        return sb
    target = max(128, (acc_budget_bytes // (4 * cmid)) // 128 * 128)
    best, t = 128, 256
    while t <= min(sb, target):
        if sb % t == 0:
            best = t
        t += 128
    return best


# --------------------------------------------------------------------------- #
# Forward wrapper
# --------------------------------------------------------------------------- #
def seghead_forward(x_nchw, w1_oihw, bn_gamma, bn_beta, bn_mean, bn_var, w2_oihw,
                    eps=1e-5, spatial_block=None, lane_tile=None,
                    compute_dtype=None):
    """SegHead forward. x_nchw: (N, Cin, H, W) -> (N, n_classes, H, W)."""
    N, Cin, H, W = x_nchw.shape
    Cmid = w1_oihw.shape[0]
    n_classes = w2_oihw.shape[0]
    HW = H * W
    cin9 = 9 * Cin
    out_dtype = x_nchw.dtype
    if compute_dtype is None:
        compute_dtype = x_nchw.dtype     # pass jnp.bfloat16 on v5e/v6e/v7x for peak MXU + half HBM
    in_item = jnp.dtype(compute_dtype).itemsize
    out_item = jnp.dtype(out_dtype).itemsize

    # ---- generation-aware VMEM budgets ----
    cap = _tpu_vmem_capacity_bytes()                 # 128 MiB v5e/v6e, 64 MiB/TC v7x
    block_budget = max(8 << 20, min(40 << 20, (cap * 3) // 8))

    if spatial_block is None:
        spatial_block = _pick_spatial_block(HW, cin9, Cmid, n_classes,
                                            in_item, out_item, block_budget, N)
    assert HW % spatial_block == 0, "spatial_block must divide H*W"
    assert spatial_block % 128 == 0 or spatial_block == HW, \
        "spatial_block must be lane-dense (multiple of 128) or the full image"
    n_blocks = HW // spatial_block

    if lane_tile is None:
        lane_tile = _pick_lane_tile(spatial_block, Cmid)
    assert spatial_block % lane_tile == 0, "lane_tile must divide spatial_block"
    n_lane_tiles = spatial_block // lane_tile

    # ---- Host/XLA-side glue: BN fold, early cast, im2col (ky & kx -> channels) ----
    inv_std = 1.0 / jnp.sqrt(bn_var + eps)
    scale = bn_gamma * inv_std                               # (Cmid,)
    shift = bn_beta - bn_mean * scale                        # (Cmid,)

    x_c = x_nchw.astype(compute_dtype)                       # cast BEFORE pad/fold
    x_pad = jnp.pad(x_c, ((0, 0), (0, 0), (1, 1), (1, 1)))   # (N, Cin, H+2, W+2)
    # xk[n, (ky*3+kx)*Cin + ci, h*W + w] = x_pad[n, ci, h+ky, w+kx]
    taps = [x_pad[:, :, ky:ky + H, kx:kx + W]
            for ky in range(3) for kx in range(3)]
    xk = jnp.concatenate(taps, axis=1).reshape(N, cin9, HW)  # channel-major, NCHW kept

    # w1k[co, (ky*3+kx)*Cin + ci] = w1[co, ci, ky, kx] * bn_scale[co]
    w1k = jnp.transpose(w1_oihw, (0, 2, 3, 1)).reshape(Cmid, cin9)
    w1k = (w1k * scale[:, None]).astype(compute_dtype)
    bias = shift.reshape(Cmid, 1).astype(jnp.float32)        # stays f32 (epilogue)
    w2 = w2_oihw[:, :, 0, 0].astype(compute_dtype)           # (n_classes, Cmid)

    # vmem limit: enough for the chosen blocks (incl. double-buffered weights),
    # capped well inside physical per-core VMEM.
    w_bytes = (Cmid * cin9 + n_classes * Cmid) * in_item + Cmid * 4
    need = 2 * (spatial_block * cin9 * in_item
                + spatial_block * n_classes * out_item) + 2 * w_bytes
    vmem_limit = int(min(max(need + (8 << 20), min((cap * 3) // 4, 100 << 20)),
                         (cap * 9) // 10))

    kernel = functools.partial(_seghead_kernel,
                               lane_tile=lane_tile, n_lane_tiles=n_lane_tiles)

    out_flat = pl.pallas_call(
        kernel,
        out_shape=jax.ShapeDtypeStruct((N, n_classes, HW), out_dtype),
        grid_spec=pltpu.PrefetchScalarGridSpec(
            num_scalar_prefetch=0,
            grid=(N, n_blocks),
            in_specs=[
                # TODO(synk): if profiling shows exposed DMA on the input stream,
                # add pipeline_mode=pl.Buffered(3) here (check VMEM budget on v7x).
                pl.BlockSpec((None, cin9, spatial_block),
                             lambda n, s: (n, 0, s)),
                pl.BlockSpec((Cmid, cin9), lambda n, s: (0, 0)),
                pl.BlockSpec((Cmid, 1), lambda n, s: (0, 0)),
                pl.BlockSpec((n_classes, Cmid), lambda n, s: (0, 0)),
            ],
            out_specs=pl.BlockSpec((None, n_classes, spatial_block),
                                   lambda n, s: (n, 0, s)),
        ),
        compiler_params=pltpu.CompilerParams(
            dimension_semantics=("parallel", "parallel"),
            vmem_limit_bytes=vmem_limit,
        ),
    )(xk, w1k, bias, w2)

    # Free reshape of contiguous dims (no transpose, no extra HBM round trip).
    return out_flat.reshape(N, n_classes, H, W)


# --------------------------------------------------------------------------- #
# Reference + test
# --------------------------------------------------------------------------- #
def _reference(x_nchw, w1_oihw, bn_gamma, bn_beta, bn_mean, bn_var, w2_oihw, eps=1e-5):
    """Pure-JAX reference (lax conv) for correctness check."""
    y = jax.lax.conv_general_dilated(
        x_nchw, w1_oihw, window_strides=(1, 1), padding=((1, 1), (1, 1)),
        dimension_numbers=("NCHW", "OIHW", "NCHW"))
    scale = (bn_gamma / jnp.sqrt(bn_var + eps)).reshape(1, -1, 1, 1)
    shift = (bn_beta - bn_mean * bn_gamma / jnp.sqrt(bn_var + eps)).reshape(1, -1, 1, 1)
    y = jnp.maximum(y * scale + shift, 0.0)
    return jax.lax.conv_general_dilated(
        y, w2_oihw, window_strides=(1, 1), padding="VALID",
        dimension_numbers=("NCHW", "OIHW", "NCHW"))


if __name__ == "__main__":
    # Small shapes consistent with SegHead(in_channels, out_channels, n_classes)
    N, Cin, H, W = 2, 4, 16, 16
    Cmid, n_classes = 32, 8

    key = jax.random.PRNGKey(0)
    k_x, k_w1, k_w2, k_g, k_b, k_m, k_v = jax.random.split(key, 7)

    x = jax.random.normal(k_x, (N, Cin, H, W), dtype=jnp.float32)

    # kaiming_normal_(a=1): gain = sqrt(2/(1+1^2)) = 1, std = gain / sqrt(fan_in)
    std1 = 1.0 / jnp.sqrt(jnp.float32(Cin * 3 * 3))
    std2 = 1.0 / jnp.sqrt(jnp.float32(Cmid * 1 * 1))
    w1 = jax.random.normal(k_w1, (Cmid, Cin, 3, 3), dtype=jnp.float32) * std1
    w2 = jax.random.normal(k_w2, (n_classes, Cmid, 1, 1), dtype=jnp.float32) * std2

    # BatchNorm2d in eval mode with non-trivial running stats (exercises the fold).
    bn_gamma = 1.0 + 0.1 * jax.random.normal(k_g, (Cmid,), jnp.float32)
    bn_beta = 0.1 * jax.random.normal(k_b, (Cmid,), jnp.float32)
    bn_mean = 0.1 * jax.random.normal(k_m, (Cmid,), jnp.float32)
    bn_var = jax.random.uniform(k_v, (Cmid,), jnp.float32, 0.5, 1.5)

    ref = _reference(x, w1, bn_gamma, bn_beta, bn_mean, bn_var, w2)

    # f32 path: explicit spatial_block=128 -> grid (2, 2), lane-dense 128 blocks.
    out_f32 = seghead_forward(x, w1, bn_gamma, bn_beta, bn_mean, bn_var, w2,
                              spatial_block=128)
    out_f32 = jax.block_until_ready(out_f32)
    assert out_f32.shape == (N, n_classes, H, W)
    assert jnp.allclose(out_f32, ref, atol=1e-4, rtol=1e-4), "f32 mismatch vs reference"

    # bf16 compute path (valid on v5e/v6e/v7x): auto block picking, loose tolerance.
    out_bf16 = seghead_forward(x, w1, bn_gamma, bn_beta, bn_mean, bn_var, w2,
                               compute_dtype=jnp.bfloat16)
    out_bf16 = jax.block_until_ready(out_bf16)
    assert out_bf16.shape == (N, n_classes, H, W)
    assert jnp.allclose(out_bf16.astype(jnp.float32), ref, atol=1e-1, rtol=1e-1), \
        "bf16 mismatch vs reference"

    print("KERNEL_OK")
</pallas_src>

<mosaic_0001>
module attributes {stable_mosaic.version = 11 : i64} {
  func.func @_seghead_kernel(%arg0: i32, %arg1: i32, %arg2: memref<1x36x128xf32, #tpu.memory_space<vmem>>, %arg3: memref<32x36xf32, #tpu.memory_space<vmem>>, %arg4: memref<32x1xf32, #tpu.memory_space<vmem>>, %arg5: memref<8x32xf32, #tpu.memory_space<vmem>>, %arg6: memref<1x8x128xf32, #tpu.memory_space<vmem>>) attributes {dimension_semantics = [#tpu.dimension_semantics<parallel>, #tpu.dimension_semantics<parallel>], iteration_bounds = array<i64: 2, 2>, scalar_prefetch = 0 : i64, scratch_operands = 0 : i64, tpu.core_type = #tpu.core_type<tc>, window_params = [{transform_indices = @transform_0, window_bounds = array<i64: 1, 36, 128>}, {pipeline_mode = #tpu.pipeline_mode<synchronous>, transform_indices = @transform_1, window_bounds = array<i64: 32, 36>}, {pipeline_mode = #tpu.pipeline_mode<synchronous>, transform_indices = @transform_2, window_bounds = array<i64: 32, 1>}, {pipeline_mode = #tpu.pipeline_mode<synchronous>, transform_indices = @transform_3, window_bounds = array<i64: 8, 32>}, {transform_indices = @transform_4, window_bounds = array<i64: 1, 8, 128>}]} {
    %c0 = arith.constant 0 : index
    %c0_0 = arith.constant 0 : index
    %c0_1 = arith.constant 0 : index
    %0 = vector.load %arg2[%c0, %c0_0, %c0_1] : memref<1x36x128xf32, #tpu.memory_space<vmem>>, vector<1x36x128xf32>
    %1 = vector.shape_cast %0 : vector<1x36x128xf32> to vector<36x128xf32>
    %c0_2 = arith.constant 0 : index
    %c0_3 = arith.constant 0 : index
    %2 = vector.load %arg3[%c0_2, %c0_3] : memref<32x36xf32, #tpu.memory_space<vmem>>, vector<32x36xf32>
    %cst = arith.constant dense<0.000000e+00> : vector<32x128xf32>
    %3 = tpu.matmul %2, %1, %cst {dimension_numbers = #tpu.dot_dimension_numbers<[1], [0], [0], [1], [0, 0, 1, 1], [], []>} : vector<32x36xf32>, vector<36x128xf32>, vector<32x128xf32> -> vector<32x128xf32>
    %c0_4 = arith.constant 0 : index
    %c0_5 = arith.constant 0 : index
    %4 = vector.load %arg4[%c0_4, %c0_5] : memref<32x1xf32, #tpu.memory_space<vmem>>, vector<32x1xf32>
    %5 = vector.broadcast %4 : vector<32x1xf32> to vector<32x128xf32>
    %6 = arith.addf %3, %5 : vector<32x128xf32>
    %cst_6 = arith.constant 0.000000e+00 : f32
    %7 = vector.broadcast %cst_6 : f32 to vector<32x128xf32>
    %8 = arith.maximumf %6, %7 : vector<32x128xf32>
    %c0_7 = arith.constant 0 : index
    %c0_8 = arith.constant 0 : index
    %9 = vector.load %arg5[%c0_7, %c0_8] : memref<8x32xf32, #tpu.memory_space<vmem>>, vector<8x32xf32>
    %cst_9 = arith.constant dense<0.000000e+00> : vector<8x128xf32>
    %10 = tpu.matmul %9, %8, %cst_9 {dimension_numbers = #tpu.dot_dimension_numbers<[1], [0], [0], [1], [0, 0, 1, 1], [], []>} : vector<8x32xf32>, vector<32x128xf32>, vector<8x128xf32> -> vector<8x128xf32>
    %c0_10 = arith.constant 0 : index
    %c0_11 = arith.constant 0 : index
    %c0_12 = arith.constant 0 : index
    %11 = vector.load %arg6[%c0_10, %c0_11, %c0_12] : memref<1x8x128xf32, #tpu.memory_space<vmem>>, vector<1x8x128xf32>
    %12 = vector.shape_cast %11 : vector<1x8x128xf32> to vector<8x128xf32>
    %13 = vector.shape_cast %10 : vector<8x128xf32> to vector<1x8x128xf32>
    tpu.vector_store %arg6[%c0_10, %c0_11, %c0_12], %13 {strides = array<i32>} : memref<1x8x128xf32, #tpu.memory_space<vmem>>, vector<1x8x128xf32>,
    return
  }
  func.func @transform_0(%arg0: i32, %arg1: i32) -> (i32, i32, i32) {
    %c0_i32 = arith.constant 0 : i32
    %c0_i32_0 = arith.constant 0 : i32
    return %arg0, %c0_i32, %arg1 : i32, i32, i32
  }
  func.func @transform_1(%arg0: i32, %arg1: i32) -> (i32, i32) {
    %c0_i32 = arith.constant 0 : i32
    %c0_i32_0 = arith.constant 0 : i32
    %c0_i32_1 = arith.constant 0 : i32
    return %c0_i32, %c0_i32_0 : i32, i32
  }
  func.func @transform_2(%arg0: i32, %arg1: i32) -> (i32, i32) {
    %c0_i32 = arith.constant 0 : i32
    %c0_i32_0 = arith.constant 0 : i32
    %c0_i32_1 = arith.constant 0 : i32
    return %c0_i32, %c0_i32_0 : i32, i32
  }
  func.func @transform_3(%arg0: i32, %arg1: i32) -> (i32, i32) {
    %c0_i32 = arith.constant 0 : i32
    %c0_i32_0 = arith.constant 0 : i32
    %c0_i32_1 = arith.constant 0 : i32
    return %c0_i32, %c0_i32_0 : i32, i32
  }
  func.func @transform_4(%arg0: i32, %arg1: i32) -> (i32, i32, i32) {
    %c0_i32 = arith.constant 0 : i32
    %c0_i32_0 = arith.constant 0 : i32
    return %arg0, %c0_i32, %arg1 : i32, i32, i32
  }
}

</mosaic_0001>

<llo_original>
// kernel: tpu_custom_call.1
$region0: #{tpu_custom_call.1}
  #allocation0 [shape = 'u32[]', space=smem, size = 0x4, offset = 0x4, fixed_abs, tag = 'smem constant byte address 0x4 - core index']
  #allocation1 [shape = 'u32[144,128]{1,0:T(1,128)}', space=vmem, size = 0x12000, scoped, tag = 'internal scratch']
  %s0 = inlined_call_operand.vmem [shape: f32[2,36,256], index: 0, kind: input, shape index: {}]
  %s1 = inlined_call_operand.vmem [shape: f32[32,36], index: 1, kind: input, shape index: {}]
  %s2 = inlined_call_operand.vmem [shape: f32[32,1], index: 2, kind: input, shape index: {}]
  %s3 = inlined_call_operand.vmem [shape: f32[8,32], index: 3, kind: input, shape index: {}]
  %s4 = inlined_call_operand.hbm [shape: f32[2,8,256], index: 4, kind: output, shape index: {}]
  %s5 = sld [smem:[#allocation0]]
  $region87: #{tpu_custom_call.1} parent=0
    _
  %s7 = ssub.s32 1, %s5
  %s8 = scalar_select 0, %s7, %s5
  $region1: #{tpu_custom_call.1} parent=0
    #allocation2 [shape = 'u8[40960]{0}', space=vmem, size = 0xa000, scoped, tag = 'input window, operand 0']
    #allocation3 [shape = 'u8[8192]{0}', space=vmem, size = 0x2000, scoped, tag = 'output window, operand 0']
    #allocation4 [shape = 's32[2]{0}', space=sflag, size = 0x8, scoped, tag = 'scoped memory for tpu_custom_call.1']
    %9 = vsyncpa [#allocation4], 0
    %s10 = scalar_lea.sflag [#allocation4], 1
    %11 = vsyncpa %s10, 0
    loop: start=0, step=1, limit=6
    $region2: #{tpu_custom_call.1} parent=1 // loop_pre_header
      _
    $region3: #{tpu_custom_call.1} parent=1 // loop_header
      %s13 = sphi 0, %s17
      %p14 = scmp.ge.s32.totalorder %s13, 6
      %s20 = sphi 0, %s32
      %s21 = sphi 0, %s28
      %s22 = sphi 0, %s20
      %s23 = sphi 0, %s21
      %s24 = sphi 0, %s22
      %s25 = sphi 0, %s23
      %s37 = sphi 0, %s39
      %s40 = sphi 0, %s37
      %s41 = sphi 0, %s40
      %s57 = sphi 0, %s41
      %s61 = sphi 0, %s61
      %s63 = sphi 0, %s61
      %s64 = sphi 0, %s63
      %s78 = sphi 0, %s64
      %s82 = sphi 0, %s82
      %s84 = sphi 0, %s82
      %s85 = sphi 0, %s84
      %s99 = sphi 0, %s85
      %s103 = sphi 0, %s103
      %s105 = sphi 0, %s103
      %s106 = sphi 0, %s105
      %s120 = sphi 0, %s106
      %s128 = sphi 0, %s130
      %s131 = sphi 0, %s128
      %s132 = sphi 0, %s131
      %s148 = sphi 0, %s132
    $region4: #{tpu_custom_call.1} parent=1 // loop_header_branch
      %16 = sbr.rel (%p14) target = $region8
    $region5: #{tpu_custom_call.1} parent=1 // loop_body
      %s18 = ssub.s32 %s13, 1
      %s19 = ssub.s32 %s13, 2
      %s26 = sadd.s32 1, %s21
      %p27 = scmp.ge.s32.totalorder %s26, 2
      %s28 = scalar_select %p27, 0, %s26
      %s29 = sadd.s32 1, %s20
      %s30 = scalar_select %p27, %s29, %s20
      %p31 = scmp.ge.s32.totalorder %s30, 2
      %s32 = scalar_select %p31, 0, %s30
      %s33 = ssub.s32 %s20, %s32
      %s34 = ssub.s32 %s21, %s28
      %s35 = sor.u32 %s33, %s34
      %p36 = scmp.eq.s32.totalorder %s35, 0
      %s38 = sadd.s32 %s37, 1
      %s39 = scalar_select %p36, %s37, %s38
      %p42 = pneg %p36
      %p43 = scmp.eq.s32.totalorder %s13, 3
      %p44 = por %p42, %p43
      %p45 = scmp.ne.s32.totalorder %s37, %s40
      %p46 = scmp.eq.s32.totalorder %s13, 0
      %p47 = por %p45, %p46
      %p48 = scmp.ne.s32.totalorder %s37, %s40
      %p49 = scmp.eq.s32.totalorder %s18, 3
      %p50 = por %p48, %p49
      %p51 = scmp.ne.s32.totalorder %s40, %s41
      %p52 = scmp.eq.s32.totalorder %s18, 0
      %p53 = por %p51, %p52
      %p54 = scmp.ne.s32.totalorder %s40, %s41
      %p55 = scmp.eq.s32.totalorder %s19, 3
      %p56 = por %p54, %p55
      %p58 = scmp.ne.s32.totalorder %s41, %s57
      %p59 = scmp.eq.s32.totalorder %s19, 0
      %p60 = por %p58, %p59
      %s62 = sadd.s32 %s61, 1
      %p65 = scmp.eq.s32.totalorder %s13, 3
      %p66 = scmp.ne.s32.totalorder %s61, %s63
      %p67 = scmp.eq.s32.totalorder %s13, 0
      %p68 = por %p66, %p67
      %p69 = scmp.ne.s32.totalorder %s61, %s63
      %p70 = scmp.eq.s32.totalorder %s18, 3
      %p71 = por %p69, %p70
      %p72 = scmp.ne.s32.totalorder %s63, %s64
      %p73 = scmp.eq.s32.totalorder %s18, 0
      %p74 = por %p72, %p73
      %p75 = scmp.ne.s32.totalorder %s63, %s64
      %p76 = scmp.eq.s32.totalorder %s19, 3
      %p77 = por %p75, %p76
      %p79 = scmp.ne.s32.totalorder %s64, %s78
      %p80 = scmp.eq.s32.totalorder %s19, 0
      %p81 = por %p79, %p80
      %s83 = sadd.s32 %s82, 1
      %p86 = scmp.eq.s32.totalorder %s13, 3
      %p87 = scmp.ne.s32.totalorder %s82, %s84
      %p88 = scmp.eq.s32.totalorder %s13, 0
      %p89 = por %p87, %p88
      %p90 = scmp.ne.s32.totalorder %s82, %s84
      %p91 = scmp.eq.s32.totalorder %s18, 3
      %p92 = por %p90, %p91
      %p93 = scmp.ne.s32.totalorder %s84, %s85
      %p94 = scmp.eq.s32.totalorder %s18, 0
      %p95 = por %p93, %p94
      %p96 = scmp.ne.s32.totalorder %s84, %s85
      %p97 = scmp.eq.s32.totalorder %s19, 3
      %p98 = por %p96, %p97
      %p100 = scmp.ne.s32.totalorder %s85, %s99
      %p101 = scmp.eq.s32.totalorder %s19, 0
      %p102 = por %p100, %p101
      %s104 = sadd.s32 %s103, 1
      %p107 = scmp.eq.s32.totalorder %s13, 3
      %p108 = scmp.ne.s32.totalorder %s103, %s105
      %p109 = scmp.eq.s32.totalorder %s13, 0
      %p110 = por %p108, %p109
      %p111 = scmp.ne.s32.totalorder %s103, %s105
      %p112 = scmp.eq.s32.totalorder %s18, 3
      %p113 = por %p111, %p112
      %p114 = scmp.ne.s32.totalorder %s105, %s106
      %p115 = scmp.eq.s32.totalorder %s18, 0
      %p116 = por %p114, %p115
      %p117 = scmp.ne.s32.totalorder %s105, %s106
      %p118 = scmp.eq.s32.totalorder %s19, 3
      %p119 = por %p117, %p118
      %p121 = scmp.ne.s32.totalorder %s106, %s120
      %p122 = scmp.eq.s32.totalorder %s19, 0
      %p123 = por %p121, %p122
      %s124 = ssub.s32 %s20, %s32
      %s125 = ssub.s32 %s21, %s28
      %s126 = sor.u32 %s124, %s125
      %p127 = scmp.eq.s32.totalorder %s126, 0
      %s129 = sadd.s32 %s128, 1
      %s130 = scalar_select %p127, %s128, %s129
      %p133 = pneg %p127
      %p134 = scmp.eq.s32.totalorder %s13, 3
      %p135 = por %p133, %p134
      %p136 = scmp.ne.s32.totalorder %s128, %s131
      %p137 = scmp.eq.s32.totalorder %s13, 0
      %p138 = por %p136, %p137
      %p139 = scmp.ne.s32.totalorder %s128, %s131
      %p140 = scmp.eq.s32.totalorder %s18, 3
      %p141 = por %p139, %p140
      %p142 = scmp.ne.s32.totalorder %s131, %s132
      %p143 = scmp.eq.s32.totalorder %s18, 0
      %p144 = por %p142, %p143
      %p145 = scmp.ne.s32.totalorder %s131, %s132
      %p146 = scmp.eq.s32.totalorder %s19, 3
      %p147 = por %p145, %p146
      %p149 = scmp.ne.s32.totalorder %s132, %s148
      %p150 = scmp.eq.s32.totalorder %s19, 0
      %p151 = por %p149, %p150
      %p152 = scmp.le.s32.totalorder 1, %s13
      %p153 = scmp.lt.s32.totalorder %s13, 5
      %p154 = pnand %p152, %p153
      %p155 = pneg %p154
      // Predicated region
      $region9: #{tpu_custom_call.1} parent=5 // pred_check
        _
      $region10: #{tpu_custom_call.1} parent=5 // pred_check_branch
        %157 = sbr.rel (%p154) target = $region12
      $region11: #{tpu_custom_call.1} parent=5 // pred_region
        %s158 = ssub.s32 %s13, 1
        // Predicated region
        $region13: #{tpu_custom_call.1} parent=11 // pred_check
          %p159 = pneg %p74
        $region14: #{tpu_custom_call.1} parent=11 // pred_check_branch
          %161 = sbr.rel (%p159) target = $region16
        $region15: #{tpu_custom_call.1} parent=11 // pred_region
          _
        $region16: #{tpu_custom_call.1} parent=11 // pred_fallthru
          _
        // Predicated region
        $region17: #{tpu_custom_call.1} parent=11 // pred_check
          %p162 = pneg %p95
        $region18: #{tpu_custom_call.1} parent=11 // pred_check_branch
          %164 = sbr.rel (%p162) target = $region20
        $region19: #{tpu_custom_call.1} parent=11 // pred_region
          _
        $region20: #{tpu_custom_call.1} parent=11 // pred_fallthru
          _
        // Predicated region
        $region21: #{tpu_custom_call.1} parent=11 // pred_check
          %p165 = pneg %p116
        $region22: #{tpu_custom_call.1} parent=11 // pred_check_branch
          %167 = sbr.rel (%p165) target = $region24
        $region23: #{tpu_custom_call.1} parent=11 // pred_region
          _
        $region24: #{tpu_custom_call.1} parent=11 // pred_fallthru
          _
      $region12: #{tpu_custom_call.1} parent=5 // pred_fallthru
        _
      %p168 = scmp.lt.s32.totalorder %s13, 4
      // Predicated region
      $region25: #{tpu_custom_call.1} parent=5 // pred_check
        %p169 = pneg %p168
      $region26: #{tpu_custom_call.1} parent=5 // pred_check_branch
        %171 = sbr.rel (%p169) target = $region28
      $region27: #{tpu_custom_call.1} parent=5 // pred_region
        // Predicated region
        $region29: #{tpu_custom_call.1} parent=27 // pred_check
          %p172 = pneg %p47
        $region30: #{tpu_custom_call.1} parent=27 // pred_check_branch
          %174 = sbr.rel (%p172) target = $region32
        $region31: #{tpu_custom_call.1} parent=27 // pred_region
          %s175 = sand.u32 %s37, 1
          %s176 = sand.u32 %s37, 1
          %s177 = smul.addr %s176, 40
          %s178 = scalar_lea.vmem [#allocation2], %s177
          %s179 = smul.addr %s20, 10
          %s180 = sadd.s32 %s21, %s179
          %s181 = smul.addr %s180, 8
          %s182 = scalar_lea.vmem %s0, %s181
          // Predicated region
          $region33: #{tpu_custom_call.1} parent=31 // pred_check
            _
          $region34: #{tpu_custom_call.1} parent=31 // pred_check_branch
            %184 = sbr.rel (0) target = $region36
          $region35: #{tpu_custom_call.1} parent=31 // pred_region
            // Predicated region
            $region37: #{tpu_custom_call.1} parent=35 // pred_check
              _
            $region38: #{tpu_custom_call.1} parent=35 // pred_check_branch
              %186 = sbr.rel (0) target = $region40
            $region39: #{tpu_custom_call.1} parent=35 // pred_region
              // Predicated region
              $region52: #{tpu_custom_call.1} parent=39 // pred_check
                _
              $region53: #{tpu_custom_call.1} parent=39 // pred_check_branch
                %210 = sbr.rel (0) target = $region55
              $region54: #{tpu_custom_call.1} parent=39 // pred_region
                loop: start=0, step=1, limit=1
                $region56: #{tpu_custom_call.1} parent=54 // loop_pre_header
                  _
                $region57: #{tpu_custom_call.1} parent=54 // loop_header
                  %s212 = sphi 0, %s216
                  %p213 = scmp.ge.s32.totalorder %s212, 1
                  %s217 = sphi %s182, %s182
                  %s218 = sphi %s178, %s178
                $region58: #{tpu_custom_call.1} parent=54 // loop_header_branch
                  %215 = sbr.rel (%p213) target = $region62
                $region59: #{tpu_custom_call.1} parent=54 // loop_body
                  %v219 = vld [vmem:[%s217] sm:$0xff]
                  %220 = vst [vmem:[%s218] sm:$0xff] %v219
                  %v221 = vld [vmem:[%s217 + $0x10] sm:$0xff]
                  %222 = vst [vmem:[%s218 + $0x8] sm:$0xff] %v221
                  %v223 = vld [vmem:[%s217 + $0x20] sm:$0xff]
                  %224 = vst [vmem:[%s218 + $0x10] sm:$0xff] %v223
                  %v225 = vld [vmem:[%s217 + $0x30] sm:$0xff]
                  %226 = vst [vmem:[%s218 + $0x18] sm:$0xff] %v225
                  %v227 = vld [vmem:[%s217 + $0x40] sm:$0xff]
                  %228 = vst [vmem:[%s218 + $0x20] sm:$0xff] %v227
                $region60: #{tpu_custom_call.1} parent=54 // loop_footer
                  %s216 = sadd.s32 1, %s212
                $region61: #{tpu_custom_call.1} parent=54 // loop_footer_branch
                  %211 = sbr.rel target = $region57
                $region62: #{tpu_custom_call.1} parent=54 // loop_exit
                  _
              $region55: #{tpu_custom_call.1} parent=39 // pred_fallthru
                _
              // Predicated region
              $region63: #{tpu_custom_call.1} parent=39 // pred_check
                _
              $region64: #{tpu_custom_call.1} parent=39 // pred_check_branch
                %230 = sbr.rel target = $region66
              $region65: #{tpu_custom_call.1} parent=39 // pred_region
                _
              $region66: #{tpu_custom_call.1} parent=39 // pred_fallthru
                _
            $region40: #{tpu_custom_call.1} parent=35 // pred_fallthru
              _
            // Predicated region
            $region41: #{tpu_custom_call.1} parent=35 // pred_check
              _
            $region42: #{tpu_custom_call.1} parent=35 // pred_check_branch
              %188 = sbr.rel target = $region44
            $region43: #{tpu_custom_call.1} parent=35 // pred_region
              %s190 = ssub.s32 256, 1
              loop: start=0, step=1, limit=1
              $region45: #{tpu_custom_call.1} parent=43 // loop_pre_header
                _
              $region46: #{tpu_custom_call.1} parent=43 // loop_header
                %s192 = sphi 0, %s196
                %p193 = scmp.ge.s32.totalorder %s192, 1
                %s197 = sphi %s182, %s182
                %s198 = sphi %s178, %s178
              $region47: #{tpu_custom_call.1} parent=43 // loop_header_branch
                %195 = sbr.rel (%p193) target = $region51
              $region48: #{tpu_custom_call.1} parent=43 // loop_body
                %v199 = vld [vmem:[%s197] sm:%s190]
                %200 = vst [vmem:[%s198] sm:%s190] %v199
                %v201 = vld [vmem:[%s197 + $0x10] sm:%s190]
                %202 = vst [vmem:[%s198 + $0x8] sm:%s190] %v201
                %v203 = vld [vmem:[%s197 + $0x20] sm:%s190]
                %204 = vst [vmem:[%s198 + $0x10] sm:%s190] %v203
                %v205 = vld [vmem:[%s197 + $0x30] sm:%s190]
                %206 = vst [vmem:[%s198 + $0x18] sm:%s190] %v205
                %v207 = vld [vmem:[%s197 + $0x40] sm:%s190]
                %208 = vst [vmem:[%s198 + $0x20] sm:%s190] %v207
              $region49: #{tpu_custom_call.1} parent=43 // loop_footer
                %s196 = sadd.s32 1, %s192
              $region50: #{tpu_custom_call.1} parent=43 // loop_footer_branch
                %191 = sbr.rel target = $region46
              $region51: #{tpu_custom_call.1} parent=43 // loop_exit
                _
            $region44: #{tpu_custom_call.1} parent=35 // pred_fallthru
              _
          $region36: #{tpu_custom_call.1} parent=31 // pred_fallthru
            _
          %231 = vnop
        $region32: #{tpu_custom_call.1} parent=27 // pred_fallthru
          _
      $region28: #{tpu_custom_call.1} parent=5 // pred_fallthru
        _
      %p232 = scmp.le.s32.totalorder 1, %s13
      %p233 = scmp.lt.s32.totalorder %s13, 5
      %p234 = pnand %p232, %p233
      %p235 = pneg %p234
      // Predicated region
      $region67: #{tpu_custom_call.1} parent=5 // pred_check
        _
      $region68: #{tpu_custom_call.1} parent=5 // pred_check_branch
        %237 = sbr.rel (%p234) target = $region70
      $region69: #{tpu_custom_call.1} parent=5 // pred_region
        %s238 = ssub.s32 %s13, 1
        %s239 = sand.u32 %s40, 1
        %s240 = sand.u32 %s40, 1
        %s241 = smul.addr %s240, 40
        %s242 = scalar_lea.vmem [#allocation2], %s241
        // Predicated region
        $region71: #{tpu_custom_call.1} parent=69 // pred_check
          %p243 = pneg %p53
        $region72: #{tpu_custom_call.1} parent=69 // pred_check_branch
          %245 = sbr.rel (%p243) target = $region74
        $region73: #{tpu_custom_call.1} parent=69 // pred_region
          _
        $region74: #{tpu_custom_call.1} parent=69 // pred_fallthru
          _
        %s246 = sand.u32 %s40, 1
        %s247 = sand.u32 %s40, 1
        %s248 = smul.addr %s247, 40
        %s249 = scalar_lea.vmem [#allocation2], %s248
        %p250 = pneg %p53
        %p251 = pneg %p50
        %p252 = pneg %p74
        %p253 = pneg %p71
        %p254 = pneg %p95
        %p255 = pneg %p92
        %p256 = pneg %p116
        %p257 = pneg %p113
        %p258 = pneg %p144
        %p259 = pneg %p141
        %s260 = sand.u32 %s131, 1
        %s261 = scalar_lea.sflag [#allocation4], %s260
        %s262 = sand.u32 %s131, 1
        %s263 = smul.addr %s262, 8
        %s264 = scalar_lea.vmem [#allocation3], %s263
        %v265 = vld [vmem:[%s242] sm:$0xff]
        %v266 = vld [vmem:[%s242 + $0x8] sm:$0xff]
        %v267 = vld [vmem:[%s242 + $0x10] sm:$0xff]
        %v268 = vld [vmem:[%s242 + $0x18] sm:$0xff]
        %v269 = vld [vmem:[%s242 + $0x20] sm:$0xf]
        %v270 = vld [vmem:[%s1] sm:$0xff]
        %v271 = vld [vmem:[%s1 + $0x8] sm:$0xff]
        %v272 = vld [vmem:[%s1 + $0x10] sm:$0xff]
        %v273 = vld [vmem:[%s1 + $0x18] sm:$0xff]
        %v274 = vld [vmem:[%s2] sm:$0xff]
        %v275 = vld [vmem:[%s2 + $0x8] sm:$0xff]
        %v276 = vld [vmem:[%s2 + $0x10] sm:$0xff]
        %v277 = vld [vmem:[%s2 + $0x18] sm:$0xff]
        %279 = vset.pattern.permute.xlu0 0
        %280 = vperm.xlu0 %279, %v274
        %v281 = vpop.permute.xlu0 %280
        %284 = vset.pattern.permute.xlu0 0
        %285 = vperm.xlu0 %284, %v275
        %v286 = vpop.permute.xlu0 %285
        %289 = vset.pattern.permute.xlu0 0
        %290 = vperm.xlu0 %289, %v276
        %v291 = vpop.permute.xlu0 %290
        %294 = vset.pattern.permute.xlu0 0
        %295 = vperm.xlu0 %294, %v277
        %v296 = vpop.permute.xlu0 %295
        %vm298 = vcmask 293888
        %v300 = vsel %vm298, %v270, 0
        %v303 = vsel %vm298, %v271, 0
        %v306 = vsel %vm298, %v272, 0
        %v309 = vsel %vm298, %v273, 0
        %vm311 = vcmask 1043456
        %v313 = vsel %vm311, %v269, 0
        %315 = vmatprep.subr.mxu0 0.0
        %316 = vmatpush1.msra.mxu0 0.0
        %317 = vmatprep.subr.mxu0 0.0
        %318 = vmatpush1.msra.mxu0 0.0
        %319 = vmatprep.subr.mxu0 0.0
        %320 = vmatpush1.msra.mxu0 0.0
        %321 = vmatprep.subr.mxu0 0.0
        %322 = vmatpush1.msra.mxu0 0.0
        %323 = vmatprep.subr.mxu0 0.0
        %324 = vmatpush1.msra.mxu0 0.0
        %325 = vmatprep.subr.mxu0 0.0
        %326 = vmatpush1.msra.mxu0 0.0
        %327 = vmatprep.subr.mxu0 0.0
        %328 = vmatpush1.msra.mxu0 0.0
        %329 = vmatprep.subr.mxu0 0.0
        %330 = vmatpush1.msra.mxu0 0.0
        %331 = vmatprep.subr.mxu0 0.0
        %332 = vmatpush1.msra.mxu0 0.0
        %333 = vmatprep.subr.mxu0 0.0
        %334 = vmatpush1.msra.mxu0 0.0
        %335 = vmatprep.subr.mxu0 0.0
        %336 = vmatpush1.msra.mxu0 0.0
        %337 = vmatprep.subr.mxu0 0.0
        %338 = vmatpush1.msra.mxu0 %v313
        %339 = vmatprep.subr.mxu0 0.0
        %340 = vmatpush1.msra.mxu0 %v268
        %341 = vmatprep.subr.mxu0 0.0
        %342 = vmatpush1.msra.mxu0 %v267
        %343 = vmatprep.subr.mxu0 0.0
        %344 = vmatpush1.msra.mxu0 %v266
        %345 = vmatprep.subr.mxu0 0.0
        %346 = vmatpush1.msra.mxu0 %v265
        %347 = vmatprep.subr.mxu0 0.0
        %348 = vmatpush2.msra.mxu0 0.0
        %349 = vmatprep.subr.mxu0 0.0
        %350 = vmatpush2.msra.mxu0 0.0
        %351 = vmatprep.subr.mxu0 0.0
        %352 = vmatpush2.msra.mxu0 0.0
        %353 = vmatprep.subr.mxu0 0.0
        %354 = vmatpush2.msra.mxu0 0.0
        %355 = vmatprep.subr.mxu0 0.0
        %356 = vmatpush2.msra.mxu0 0.0
        %357 = vmatprep.subr.mxu0 0.0
        %358 = vmatpush2.msra.mxu0 0.0
        %359 = vmatprep.subr.mxu0 0.0
        %360 = vmatpush2.msra.mxu0 0.0
        %361 = vmatprep.subr.mxu0 0.0
        %362 = vmatpush2.msra.mxu0 0.0
        %363 = vmatprep.subr.mxu0 0.0
        %364 = vmatpush2.msra.mxu0 0.0
        %365 = vmatprep.subr.mxu0 0.0
        %366 = vmatpush2.msra.mxu0 0.0
        %367 = vmatprep.subr.mxu0 0.0
        %368 = vmatpush2.msra.mxu0 0.0
        %369 = vmatprep.subr.mxu0 0.0
        %370 = vmatpush2.msra.mxu0 0.0
        %371 = vmatprep.subr.mxu0 0.0
        %372 = vmatpush2.msra.mxu0 0.0
        %373 = vmatprep.subr.mxu0 0.0
        %374 = vmatpush2.msra.mxu0 0.0
        %375 = vmatprep.subr.mxu0 0.0
        %376 = vmatpush2.msra.mxu0 0.0
        %377 = vmatprep.subr.mxu0 0.0
        %378 = vmatpush2.msra.mxu0 0.0
        %379 = vmatprep.mubr.f32.mxu0 0.0
        %380 = vmatmul.mubr.f32.gmra.mxu0 %v300
        %v381 = vpop.f32.mrf.mxu0
        %v382 = vadd.f32 %v281, %v381
        %v383 = vpop.f32.mrf.mxu0
        %384 = vmatprep.mubr.f32.mxu0 0.0
        %385 = vmatmul.mubr.f32.gmra.mxu0 %v303
        %v386 = vpop.f32.mrf.mxu0
        %v387 = vadd.f32 %v286, %v386
        %v388 = vpop.f32.mrf.mxu0
        %389 = vmatprep.mubr.f32.mxu0 0.0
        %390 = vmatmul.mubr.f32.gmra.mxu0 %v306
        %v391 = vpop.f32.mrf.mxu0
        %v392 = vadd.f32 %v291, %v391
        %v393 = vpop.f32.mrf.mxu0
        %394 = vmatprep.mubr.f32.mxu0 0.0
        %395 = vmatmul.mubr.f32.gmra.mxu0 %v309
        %v396 = vpop.f32.mrf.mxu0
        %v397 = vadd.f32 %v296, %v396
        %v398 = vpop.f32.mrf.mxu0
        %399 = vdwg.mxu0
        %v400 = vmax.f32 %v382, 0.0
        %v401 = vmax.f32 %v387, 0.0
        %v402 = vmax.f32 %v392, 0.0
        %v403 = vmax.f32 %v397, 0.0
        %v404 = vld [vmem:[%s3] sm:$0xff]
        %vm405 = vcmask 261120
        %v407 = vsel %vm405, %v404, 0
        %409 = vmatprep.subr.mxu0 0.0
        %410 = vmatpush1.msra.mxu0 0.0
        %411 = vmatprep.subr.mxu0 0.0
        %412 = vmatpush1.msra.mxu0 0.0
        %413 = vmatprep.subr.mxu0 0.0
        %414 = vmatpush1.msra.mxu0 0.0
        %415 = vmatprep.subr.mxu0 0.0
        %416 = vmatpush1.msra.mxu0 0.0
        %417 = vmatprep.subr.mxu0 0.0
        %418 = vmatpush1.msra.mxu0 0.0
        %419 = vmatprep.subr.mxu0 0.0
        %420 = vmatpush1.msra.mxu0 0.0
        %421 = vmatprep.subr.mxu0 0.0
        %422 = vmatpush1.msra.mxu0 0.0
        %423 = vmatprep.subr.mxu0 0.0
        %424 = vmatpush1.msra.mxu0 0.0
        %425 = vmatprep.subr.mxu0 0.0
        %426 = vmatpush1.msra.mxu0 0.0
        %427 = vmatprep.subr.mxu0 0.0
        %428 = vmatpush1.msra.mxu0 0.0
        %429 = vmatprep.subr.mxu0 0.0
        %430 = vmatpush1.msra.mxu0 0.0
        %431 = vmatprep.subr.mxu0 0.0
        %432 = vmatpush1.msra.mxu0 0.0
        %433 = vmatprep.subr.mxu0 0.0
        %434 = vmatpush1.msra.mxu0 %v403
        %435 = vmatprep.subr.mxu0 0.0
        %436 = vmatpush1.msra.mxu0 %v402
        %437 = vmatprep.subr.mxu0 0.0
        %438 = vmatpush1.msra.mxu0 %v401
        %439 = vmatprep.subr.mxu0 0.0
        %440 = vmatpush1.msra.mxu0 %v400
        %441 = vmatprep.subr.mxu0 0.0
        %442 = vmatpush2.msra.mxu0 0.0
        %443 = vmatprep.subr.mxu0 0.0
        %444 = vmatpush2.msra.mxu0 0.0
        %445 = vmatprep.subr.mxu0 0.0
        %446 = vmatpush2.msra.mxu0 0.0
        %447 = vmatprep.subr.mxu0 0.0
        %448 = vmatpush2.msra.mxu0 0.0
        %449 = vmatprep.subr.mxu0 0.0
        %450 = vmatpush2.msra.mxu0 0.0
        %451 = vmatprep.subr.mxu0 0.0
        %452 = vmatpush2.msra.mxu0 0.0
        %453 = vmatprep.subr.mxu0 0.0
        %454 = vmatpush2.msra.mxu0 0.0
        %455 = vmatprep.subr.mxu0 0.0
        %456 = vmatpush2.msra.mxu0 0.0
        %457 = vmatprep.subr.mxu0 0.0
        %458 = vmatpush2.msra.mxu0 0.0
        %459 = vmatprep.subr.mxu0 0.0
        %460 = vmatpush2.msra.mxu0 0.0
        %461 = vmatprep.subr.mxu0 0.0
        %462 = vmatpush2.msra.mxu0 0.0
        %463 = vmatprep.subr.mxu0 0.0
        %464 = vmatpush2.msra.mxu0 0.0
        %465 = vmatprep.subr.mxu0 0.0
        %466 = vmatpush2.msra.mxu0 0.0
        %467 = vmatprep.subr.mxu0 0.0
        %468 = vmatpush2.msra.mxu0 0.0
        %469 = vmatprep.subr.mxu0 0.0
        %470 = vmatpush2.msra.mxu0 0.0
        %471 = vmatprep.subr.mxu0 0.0
        %472 = vmatpush2.msra.mxu0 0.0
        %473 = vmatprep.mubr.f32.mxu0 0.0
        %474 = vmatmul.mubr.f32.gmra.mxu0 %v407
        %v475 = vpop.f32.mrf.mxu0
        %v476 = vadd.f32 0.0, %v475
        %v477 = vpop.f32.mrf.mxu0
        %478 = vdwg.mxu0
        %479 = vst [vmem:[%s264] sm:$0xff] %v476
        %s480 = sand.u32 %s131, 1
        %s481 = scalar_lea.sflag [#allocation4], %s480
        %s482 = sand.u32 %s131, 1
        %s483 = smul.addr %s482, 8
        %s484 = scalar_lea.vmem [#allocation3], %s483
        // Predicated region
        $region75: #{tpu_custom_call.1} parent=69 // pred_check
          %p485 = pneg %p141
        $region76: #{tpu_custom_call.1} parent=69 // pred_check_branch
          %487 = sbr.rel (%p485) target = $region78
        $region77: #{tpu_custom_call.1} parent=69 // pred_region
          %s489 = ssub.s32 128, 128
          %490 = vsyncadd %s481, %s489
          %s491 = smul.addr %s22, 2
          %s492 = sadd.s32 %s23, %s491
          %s493 = smul.addr %s492, 128
          %s494 = scalar_lea.hbm %s4, %s493
          %s496 = sshll.u32 %s484, 4
          %s497 = int_to_ptr.vmem [resolvable:$true] %s496
          %499 = dma.vmem_to_hbm [thread:$0]  %s497, 128, %s494, %s481
        $region78: #{tpu_custom_call.1} parent=69 // pred_fallthru
          _
      $region70: #{tpu_custom_call.1} parent=5 // pred_fallthru
        _
      %p500 = scmp.le.s32.totalorder 2, %s13
      // Predicated region
      $region79: #{tpu_custom_call.1} parent=5 // pred_check
        %p501 = pneg %p500
      $region80: #{tpu_custom_call.1} parent=5 // pred_check_branch
        %503 = sbr.rel (%p501) target = $region82
      $region81: #{tpu_custom_call.1} parent=5 // pred_region
        %s504 = ssub.s32 %s13, 2
        // Predicated region
        $region83: #{tpu_custom_call.1} parent=81 // pred_check
          %p505 = pneg %p147
        $region84: #{tpu_custom_call.1} parent=81 // pred_check_branch
          %507 = sbr.rel (%p505) target = $region86
        $region85: #{tpu_custom_call.1} parent=81 // pred_region
          %s508 = sand.u32 %s132, 1
          %s509 = scalar_lea.sflag [#allocation4], %s508
          %s510 = sand.u32 %s132, 1
          %s511 = smul.addr %s510, 8
          %s512 = scalar_lea.vmem [#allocation3], %s511
          %513 = dma.done %s509, 128
        $region86: #{tpu_custom_call.1} parent=81 // pred_fallthru
          _
      $region82: #{tpu_custom_call.1} parent=5 // pred_fallthru
        _
    $region6: #{tpu_custom_call.1} parent=1 // loop_footer
      %s17 = sadd.s32 1, %s13
    $region7: #{tpu_custom_call.1} parent=1 // loop_footer_branch
      %12 = sbr.rel target = $region3
    $region8: #{tpu_custom_call.1} parent=1 // loop_exit
      _
    %514 = vsyncpa [#allocation4], 1
    %s515 = scalar_lea.sflag [#allocation4], 1
    %516 = vsyncpa %s515, 1

</llo_original>
